<compile_context>
chip_gen: v5e
topology: v5e:2x2
jax: 0.10.0
libtpu: 0.0.40
codegen_flags: <defaults>
</compile_context>

<pallas_src>
import numpy as np
import jax
import jax.numpy as jnp
from jax.experimental import pallas as pl
from jax.experimental.pallas import tpu as pltpu


# ---------------- Pallas kernels ----------------

def _pae_add_kernel(x_ref, enc_ref, o_ref):
    # concat=False:  out = x + repeat_interleave(enc, B, axis=batch)
    # x_ref: (tS, B, D), enc_ref: (tS, 1, D) -> broadcast over the batch
    # (sublane) axis.  Pure VPU, memory-bound.
    o_ref[...] = x_ref[...] + enc_ref[...]


def _pae_concat_kernel(x_ref, bias_ref, e_ref, wx_ref, o_ref):
    # concat=True:  out = concat([x, pe(, ae)], -1) @ W.T + b
    #                   = x @ Wx + repeat_interleave(pe @ Wp (+ ae @ Wa) + b, B)
    # x_ref: (TM, D), wx_ref: (D, D), bias_ref: (tS, D), e_ref: (TM, tS) 0/1
    # selector realizing the batch repeat of the hoisted bias table.
    acc = jnp.dot(x_ref[...], wx_ref[...], preferred_element_type=jnp.float32)
    acc = acc + jnp.dot(e_ref[...], bias_ref[...],
                        preferred_element_type=jnp.float32)
    o_ref[...] = acc.astype(o_ref.dtype)


# ---------------- tiling heuristics ----------------

def _sublane_pack(itemsize):
    # rows per packed sublane tile: 8 (f32), 16 (bf16), 32 (int8/fp8)
    return max(8, 32 // max(1, itemsize))


def _largest_divisor_le(n, target):
    target = max(1, min(int(target), n))
    for d in range(target, 0, -1):
        if n % d == 0:
            return d
    return n


def _pick_ts_add(S, B, D, itemsize, x_budget=6 << 20):
    """Timesteps per block for the add path (3-D blocks, no alignment on tS)."""
    ts = max(1, x_budget // max(1, B * D * itemsize))     # ~6 MiB of x per block
    ts = min(ts, max(1, -(-S // 2)))                      # >=2 grid steps (v7x 2 TCs)
    return _largest_divisor_le(S, ts)                     # exact coverage of S


def _pick_ts_concat(S, B, D, itemsize, x_budget=4 << 20, e_budget=2 << 20):
    """Timesteps per block for the concat path (2-D flattened view).

    tS is bounded by the x-block byte budget AND the (tS*B, tS) selector tile
    (tS^2*B bytes), must be sublane-aligned so the (tS, D) bias block and the
    (tS*B, D) x block are legal, and must divide S.  Falls back to tS = S
    (full-array blocks are always legal)."""
    pack = _sublane_pack(itemsize)
    ts_x = x_budget // max(1, B * D * itemsize)
    ts_e = int((e_budget / max(1, B * itemsize)) ** 0.5)
    target = min(ts_x, ts_e)
    target = min(target, max(pack, -(-S // 2)))           # prefer >=2 grid steps
    target = max(pack, target)
    target = min(target, S)
    for d in range(target, 0, -1):
        if S % d == 0 and d % pack == 0:
            return d
    return S


# ---------------- module (params + glue) ----------------

def build_pos_enc(max_len, d_model):
    # exact port of PositionalAgentEncoding.build_pos_enc (kept as (L, D))
    position = np.arange(0, max_len, dtype=np.float32)[:, None]
    div_term = np.exp(np.arange(0, d_model, 2, dtype=np.float32)
                      * (-np.log(10000.0) / d_model))
    pe = np.zeros((max_len, d_model), np.float32)
    pe[:, 0::2] = np.sin(position * div_term)
    pe[:, 1::2] = np.cos(position * div_term)
    return jnp.asarray(pe)


class PositionalAgentEncoding:
    def __init__(self, d_model, dropout=0.1, max_t_len=200, max_a_len=200,
                 concat=False, use_agent_enc=False, agent_enc_learn=False, key=None):
        if key is None:
            key = jax.random.PRNGKey(0)
        self.d_model = d_model
        self.concat = concat
        self.use_agent_enc = use_agent_enc
        self.pe = build_pos_enc(max_t_len, d_model)              # (max_t_len, D)
        self.ae = None
        self._e_cache = {}                                       # selector cache
        if use_agent_enc:
            if agent_enc_learn:
                key, sub = jax.random.split(key)
                self.ae = jax.random.normal(sub, (max_a_len, d_model),
                                            dtype=jnp.float32) * 0.1
            else:
                self.ae = build_pos_enc(max_a_len, d_model)      # (max_a_len, D)
        if concat:
            in_dim = (3 if use_agent_enc else 2) * d_model
            key, kw, kb = jax.random.split(key, 3)
            bound = 1.0 / np.sqrt(in_dim)                        # nn.Linear default init
            self.fc_w = jax.random.uniform(kw, (d_model, in_dim), jnp.float32,
                                           minval=-bound, maxval=bound)
            self.fc_b = jax.random.uniform(kb, (d_model,), jnp.float32,
                                           minval=-bound, maxval=bound)
            # pre-sliced / pre-transposed weight blocks and batch-independent
            # encoding projections (done once, in full f32, at construction)
            W = np.asarray(self.fc_w)
            self.w_x = jnp.asarray(np.ascontiguousarray(W[:, :d_model].T))       # (D, D)
            self.pe_proj = jnp.asarray(np.asarray(self.pe)
                                       @ W[:, d_model:2 * d_model].T)            # (max_t_len, D)
            if use_agent_enc:
                self.ae_proj = jnp.asarray(np.asarray(self.ae)
                                           @ W[:, 2 * d_model:3 * d_model].T)    # (max_a_len, D)

    def _selector(self, TM, ts, B, dtype):
        # 0/1 matrix: flattened row r of an x tile belongs to encoding row r // B.
        # Built host-side once and cached per (TM, tS, B, dtype).
        key = (TM, ts, B, jnp.dtype(dtype).str)
        e = self._e_cache.get(key)
        if e is None:
            e_np = (np.arange(TM)[:, None] // B == np.arange(ts)[None, :])
            e = jnp.asarray(e_np.astype(np.float32)).astype(dtype)   # 0/1 exact in bf16
            self._e_cache[key] = e
        return e

    def __call__(self, x, num_a, agent_enc_shuffle=None, t_offset=0, a_offset=0):
        S, B, D = x.shape
        assert D == self.d_model and S % num_a == 0
        dtype = x.dtype
        itemsize = jnp.dtype(dtype).itemsize

        s_idx = jnp.arange(S)
        t_rows = t_offset + s_idx // num_a                       # (S,) pe row per seq pos
        if self.use_agent_enc:
            if agent_enc_shuffle is None:
                a_rows = a_offset + (s_idx % num_a)
            else:
                a_rows = jnp.asarray(agent_enc_shuffle)[s_idx % num_a]

        cparams = pltpu.CompilerParams(
            dimension_semantics=("parallel",),
            vmem_limit_bytes=48 * 1024 * 1024,
        )

        if self.concat:
            ts = _pick_ts_concat(S, B, D, itemsize)
            TM = ts * B
            grid = (S // ts,)
            x2 = x.reshape(S * B, D)                             # free contiguous view
            # batch-independent part of the Linear, per sequence row: (S, D)
            bias = self.pe_proj[t_rows] + self.fc_b[None, :]
            if self.use_agent_enc:
                bias = bias + self.ae_proj[a_rows]
            bias = bias.astype(dtype)                            # keep tables in x.dtype
            wx = self.w_x.astype(dtype)
            e_mat = self._selector(TM, ts, B, dtype)
            # E / Wx use a constant index_map -> fetched once by the pipeline.
            out = pl.pallas_call(
                _pae_concat_kernel,
                out_shape=jax.ShapeDtypeStruct((S * B, D), dtype),
                grid_spec=pltpu.PrefetchScalarGridSpec(
                    num_scalar_prefetch=0, grid=grid,
                    in_specs=[pl.BlockSpec((TM, D), lambda i: (i, 0)),
                              pl.BlockSpec((ts, D), lambda i: (i, 0)),
                              pl.BlockSpec((TM, ts), lambda i: (0, 0)),
                              pl.BlockSpec((D, D), lambda i: (0, 0))],
                    out_specs=pl.BlockSpec((TM, D), lambda i: (i, 0))),
                compiler_params=cparams,
            )(x2, bias, e_mat, wx)
            return out.reshape(S, B, D)      # dropout == identity (eval mode)

        # ---- concat=False: pure broadcast add, no MXU, no selector matrix ----
        ts = _pick_ts_add(S, B, D, itemsize)
        grid = (S // ts,)
        enc = self.pe[t_rows]
        if self.use_agent_enc:
            enc = enc + self.ae[a_rows]
        enc = enc[:, None, :].astype(dtype)                      # (S, 1, D), tiny
        out = pl.pallas_call(
            _pae_add_kernel,
            out_shape=jax.ShapeDtypeStruct((S, B, D), dtype),
            grid_spec=pltpu.PrefetchScalarGridSpec(
                num_scalar_prefetch=0, grid=grid,
                in_specs=[pl.BlockSpec((ts, B, D), lambda i: (i, 0, 0)),
                          pl.BlockSpec((ts, 1, D), lambda i: (i, 0, 0))],
                out_specs=pl.BlockSpec((ts, B, D), lambda i: (i, 0, 0))),
            compiler_params=cparams,
        )(x, enc)
        return out                           # dropout == identity (eval mode)


# ---------------- pure-numpy reference ----------------

def reference(mod, x, num_a, t_offset=0, a_offset=0):
    S, B, D = x.shape
    s_idx = np.arange(S)
    pe = np.asarray(mod.pe)
    pe_full = np.broadcast_to(pe[t_offset + s_idx // num_a][:, None, :], (S, B, D))
    feats = [np.asarray(x, np.float32), pe_full]
    if mod.use_agent_enc:
        ae = np.asarray(mod.ae)
        feats.append(np.broadcast_to(ae[a_offset + (s_idx % num_a)][:, None, :], (S, B, D)))
    if mod.concat:
        feat = np.concatenate(feats, axis=-1)
        return feat @ np.asarray(mod.fc_w).T + np.asarray(mod.fc_b)
    out = feats[0].copy()
    for f in feats[1:]:
        out = out + f
    return out


if __name__ == "__main__":
    d_model, num_a, num_t, B = 32, 4, 2, 2
    S = num_t * num_a                                  # x.shape[0] // num_a == num_t
    key = jax.random.PRNGKey(0)
    kx, kmod = jax.random.split(key)
    x = jax.random.normal(kx, (S, B, d_model), dtype=jnp.float32)

    # config 1: concat=True, use_agent_enc=True  (x @ Wx + hoisted bias, MXU path)
    mod1 = PositionalAgentEncoding(d_model, concat=True, use_agent_enc=True, key=kmod)
    out1 = jax.block_until_ready(mod1(x, num_a, t_offset=1, a_offset=2))
    ref1 = reference(mod1, x, num_a, t_offset=1, a_offset=2)
    np.testing.assert_allclose(np.asarray(out1), ref1, rtol=1e-5, atol=1e-5)

    # config 2: default (concat=False, use_agent_enc=False)  (broadcast-add path)
    mod2 = PositionalAgentEncoding(d_model, key=kmod)
    out2 = jax.block_until_ready(mod2(x, num_a))
    ref2 = reference(mod2, x, num_a)
    np.testing.assert_allclose(np.asarray(out2), ref2, rtol=1e-5, atol=1e-5)

    # config 3: concat=False, use_agent_enc=True (broadcast-add with agent encoding)
    mod3 = PositionalAgentEncoding(d_model, use_agent_enc=True, key=kmod)
    out3 = jax.block_until_ready(mod3(x, num_a, a_offset=1))
    ref3 = reference(mod3, x, num_a, a_offset=1)
    np.testing.assert_allclose(np.asarray(out3), ref3, rtol=1e-5, atol=1e-5)

    assert out1.shape == (S, B, d_model) and out2.shape == (S, B, d_model)
    print("KERNEL_OK")
</pallas_src>

<mosaic_0001>
module attributes {stable_mosaic.version = 11 : i64} {
  func.func @_pae_concat_kernel(%arg0: i32, %arg1: memref<16x32xf32, #tpu.memory_space<vmem>>, %arg2: memref<8x32xf32, #tpu.memory_space<vmem>>, %arg3: memref<16x8xf32, #tpu.memory_space<vmem>>, %arg4: memref<32x32xf32, #tpu.memory_space<vmem>>, %arg5: memref<16x32xf32, #tpu.memory_space<vmem>>) attributes {dimension_semantics = [#tpu.dimension_semantics<parallel>], iteration_bounds = array<i64: 1>, scalar_prefetch = 0 : i64, scratch_operands = 0 : i64, tpu.core_type = #tpu.core_type<tc>, window_params = [{transform_indices = @transform_0, window_bounds = array<i64: 16, 32>}, {transform_indices = @transform_1, window_bounds = array<i64: 8, 32>}, {pipeline_mode = #tpu.pipeline_mode<synchronous>, transform_indices = @transform_2, window_bounds = array<i64: 16, 8>}, {pipeline_mode = #tpu.pipeline_mode<synchronous>, transform_indices = @transform_3, window_bounds = array<i64: 32, 32>}, {transform_indices = @transform_4, window_bounds = array<i64: 16, 32>}]} {
    %c0 = arith.constant 0 : index
    %c0_0 = arith.constant 0 : index
    %0 = vector.load %arg1[%c0, %c0_0] : memref<16x32xf32, #tpu.memory_space<vmem>>, vector<16x32xf32>
    %c0_1 = arith.constant 0 : index
    %c0_2 = arith.constant 0 : index
    %1 = vector.load %arg4[%c0_1, %c0_2] : memref<32x32xf32, #tpu.memory_space<vmem>>, vector<32x32xf32>
    %cst = arith.constant dense<0.000000e+00> : vector<16x32xf32>
    %2 = tpu.matmul %0, %1, %cst {dimension_numbers = #tpu.dot_dimension_numbers<[1], [0], [0], [1], [0, 0, 1, 1], [], []>} : vector<16x32xf32>, vector<32x32xf32>, vector<16x32xf32> -> vector<16x32xf32>
    %c0_3 = arith.constant 0 : index
    %c0_4 = arith.constant 0 : index
    %3 = vector.load %arg3[%c0_3, %c0_4] : memref<16x8xf32, #tpu.memory_space<vmem>>, vector<16x8xf32>
    %c0_5 = arith.constant 0 : index
    %c0_6 = arith.constant 0 : index
    %4 = vector.load %arg2[%c0_5, %c0_6] : memref<8x32xf32, #tpu.memory_space<vmem>>, vector<8x32xf32>
    %cst_7 = arith.constant dense<0.000000e+00> : vector<16x32xf32>
    %5 = tpu.matmul %3, %4, %cst_7 {dimension_numbers = #tpu.dot_dimension_numbers<[1], [0], [0], [1], [0, 0, 1, 1], [], []>} : vector<16x8xf32>, vector<8x32xf32>, vector<16x32xf32> -> vector<16x32xf32>
    %6 = arith.addf %2, %5 : vector<16x32xf32>
    %c0_8 = arith.constant 0 : index
    %c0_9 = arith.constant 0 : index
    %7 = vector.load %arg5[%c0_8, %c0_9] : memref<16x32xf32, #tpu.memory_space<vmem>>, vector<16x32xf32>
    tpu.vector_store %arg5[%c0_8, %c0_9], %6 {strides = array<i32>} : memref<16x32xf32, #tpu.memory_space<vmem>>, vector<16x32xf32>,
    return
  }
  func.func @transform_0(%arg0: i32) -> (i32, i32) {
    %c0_i32 = arith.constant 0 : i32
    %c0_i32_0 = arith.constant 0 : i32
    return %arg0, %c0_i32 : i32, i32
  }
  func.func @transform_1(%arg0: i32) -> (i32, i32) {
    %c0_i32 = arith.constant 0 : i32
    %c0_i32_0 = arith.constant 0 : i32
    return %arg0, %c0_i32 : i32, i32
  }
  func.func @transform_2(%arg0: i32) -> (i32, i32) {
    %c0_i32 = arith.constant 0 : i32
    %c0_i32_0 = arith.constant 0 : i32
    %c0_i32_1 = arith.constant 0 : i32
    return %c0_i32, %c0_i32_0 : i32, i32
  }
  func.func @transform_3(%arg0: i32) -> (i32, i32) {
    %c0_i32 = arith.constant 0 : i32
    %c0_i32_0 = arith.constant 0 : i32
    %c0_i32_1 = arith.constant 0 : i32
    return %c0_i32, %c0_i32_0 : i32, i32
  }
  func.func @transform_4(%arg0: i32) -> (i32, i32) {
    %c0_i32 = arith.constant 0 : i32
    %c0_i32_0 = arith.constant 0 : i32
    return %arg0, %c0_i32 : i32, i32
  }
}

</mosaic_0001>

<llo_original>
// kernel: tpu_custom_call.1
$region0: #{tpu_custom_call.1}
  #allocation0 [shape = 'u32[]', space=smem, size = 0x4, offset = 0x4, fixed_abs, tag = 'smem constant byte address 0x4 - core index']
  #allocation1 [shape = 'u32[72,128]{1,0:T(1,128)}', space=vmem, size = 0x9000, scoped, tag = 'internal scratch']
  %s0 = inlined_call_operand.vmem [shape: f32[16,32], index: 0, kind: input, shape index: {}]
  %s1 = inlined_call_operand.vmem [shape: f32[8,32], index: 1, kind: input, shape index: {}]
  %s2 = inlined_call_operand.vmem [shape: f32[16,8], index: 2, kind: input, shape index: {}]
  %s3 = inlined_call_operand.hbm [shape: f32[32,32], index: 3, kind: input, shape index: {}]
  %s4 = inlined_call_operand.hbm [shape: f32[16,32], index: 4, kind: output, shape index: {}]
  %s5 = sld [smem:[#allocation0]]
  $region30: #{tpu_custom_call.1} parent=0
    _
  %s7 = ssub.s32 1, %s5
  %s8 = scalar_select 0, %s7, %s5
  $region1: #{tpu_custom_call.1} parent=0
    #allocation2 [shape = 'u8[16384]{0}', space=vmem, size = 0x4000, scoped, tag = 'input window, operand 3, single buffered']
    #allocation3 [shape = 's32[1]{0}', space=sflag, size = 0x4, scoped, tag = 'scoped memory for tpu_custom_call.1']
    #allocation4 [shape = 's32[1]{0}', space=sflag, size = 0x4, scoped, tag = 'scoped memory for tpu_custom_call.1']
    #allocation5 [shape = 'u8[8192]{0}', space=vmem, size = 0x2000, scoped, tag = 'output window, operand 0, single buffered']
    %9 = vsyncpa [#allocation3], 0
    %10 = vsyncpa [#allocation4], 0
    // Predicated region
    $region2: #{tpu_custom_call.1} parent=1 // pred_check
      _
    $region3: #{tpu_custom_call.1} parent=1 // pred_check_branch
      %12 = sbr.rel (0) target = $region5
    $region4: #{tpu_custom_call.1} parent=1 // pred_region
      _
    $region5: #{tpu_custom_call.1} parent=1 // pred_fallthru
      _
    // Predicated region
    $region6: #{tpu_custom_call.1} parent=1 // pred_check
      _
    $region7: #{tpu_custom_call.1} parent=1 // pred_check_branch
      %14 = sbr.rel (0) target = $region9
    $region8: #{tpu_custom_call.1} parent=1 // pred_region
      _
    $region9: #{tpu_custom_call.1} parent=1 // pred_fallthru
      _
    // Predicated region
    $region10: #{tpu_custom_call.1} parent=1 // pred_check
      _
    $region11: #{tpu_custom_call.1} parent=1 // pred_check_branch
      %16 = sbr.rel (0) target = $region13
    $region12: #{tpu_custom_call.1} parent=1 // pred_region
      _
    $region13: #{tpu_custom_call.1} parent=1 // pred_fallthru
      _
    // Predicated region
    $region14: #{tpu_custom_call.1} parent=1 // pred_check
      _
    $region15: #{tpu_custom_call.1} parent=1 // pred_check_branch
      %18 = sbr.rel (0) target = $region17
    $region16: #{tpu_custom_call.1} parent=1 // pred_region
      %20 = vsyncadd [#allocation3], 0
      %s21 = sshll.u32 %s3, 4
      %s22 = int_to_ptr.hbm [resolvable:$true] %s21
      %s23 = sshll.u32 [#allocation2], 4
      %s24 = int_to_ptr.vmem [resolvable:$true] %s23
      %29 = dma.hbm_to_vmem [thread:$0]  %s22, 512, %s24, [#allocation3], 128, 128, 8
    $region17: #{tpu_custom_call.1} parent=1 // pred_fallthru
      _
    // Predicated region
    $region18: #{tpu_custom_call.1} parent=1 // pred_check
      _
    $region19: #{tpu_custom_call.1} parent=1 // pred_check_branch
      %31 = sbr.rel (0) target = $region21
    $region20: #{tpu_custom_call.1} parent=1 // pred_region
      %33 = dma.done [#allocation3], 512
    $region21: #{tpu_custom_call.1} parent=1 // pred_fallthru
      _
    %v34 = vld [vmem:[%s0] sm:$0xff]
    %v35 = vld [vmem:[%s0 + $0x8] sm:$0xff]
    %v36 = vld [vmem:[#allocation2] sm:$0xff]
    %v37 = vld [vmem:[#allocation2 + $0x8] sm:$0xff]
    %v38 = vld [vmem:[#allocation2 + $0x10] sm:$0xff]
    %v39 = vld [vmem:[#allocation2 + $0x18] sm:$0xff]
    %v40 = vld [vmem:[%s2] sm:$0xff]
    %v41 = vld [vmem:[%s2 + $0x8] sm:$0xff]
    %v42 = vld [vmem:[%s1] sm:$0xff]
    %vm43 = vcmask 64512
    %v45 = vsel %vm43, %v40, 0
    %v48 = vsel %vm43, %v41, 0
    %50 = vmatpush.msra.mxu0 0.0
    %51 = vmatpush.msra.mxu0 0.0
    %52 = vmatpush.msra.mxu0 0.0
    %53 = vmatpush.msra.mxu0 0.0
    %54 = vmatpush.msra.mxu0 0.0
    %55 = vmatpush.msra.mxu0 0.0
    %56 = vmatpush.msra.mxu0 0.0
    %57 = vmatpush.msra.mxu0 0.0
    %58 = vmatpush.msra.mxu0 0.0
    %59 = vmatpush.msra.mxu0 0.0
    %60 = vmatpush.msra.mxu0 0.0
    %61 = vmatpush.msra.mxu0 0.0
    %62 = vmatpush.msra.mxu0 0.0
    %63 = vmatpush.msra.mxu0 0.0
    %64 = vmatpush.msra.mxu0 0.0
    %65 = vmatpush.msra.mxu0 %v42
    %66 = vmatmul.f32.gmra.mxu0 %v45
    %v67 = vpop.f32.mrf.mxu0
    %v68 = vadd.f32 0.0, %v67
    %69 = vmatmul.f32.gmra.mxu0 %v48
    %v70 = vpop.f32.mrf.mxu0
    %v71 = vadd.f32 0.0, %v70
    %72 = vdwg.mxu0
    %vm73 = vcmask 261120
    %v75 = vsel %vm73, %v34, 0
    %v78 = vsel %vm73, %v35, 0
    %80 = vmatpush.msra.mxu0 0.0
    %81 = vmatpush.msra.mxu0 0.0
    %82 = vmatpush.msra.mxu0 0.0
    %83 = vmatpush.msra.mxu0 0.0
    %84 = vmatpush.msra.mxu0 0.0
    %85 = vmatpush.msra.mxu0 0.0
    %86 = vmatpush.msra.mxu0 0.0
    %87 = vmatpush.msra.mxu0 0.0
    %88 = vmatpush.msra.mxu0 0.0
    %89 = vmatpush.msra.mxu0 0.0
    %90 = vmatpush.msra.mxu0 0.0
    %91 = vmatpush.msra.mxu0 0.0
    %92 = vmatpush.msra.mxu0 %v39
    %93 = vmatpush.msra.mxu0 %v38
    %94 = vmatpush.msra.mxu0 %v37
    %95 = vmatpush.msra.mxu0 %v36
    %96 = vmatmul.f32.gmra.mxu0 %v75
    %v97 = vpop.f32.mrf.mxu0
    %v98 = vadd.f32 %v68, %v97
    %99 = vmatmul.f32.gmra.mxu0 %v78
    %v100 = vpop.f32.mrf.mxu0
    %v101 = vadd.f32 %v71, %v100
    %102 = vdwg.mxu0
    %103 = vst.msk [vmem:[#allocation5] sm:$0xff] %vm73, %v98
    %104 = vst.msk [vmem:[#allocation5 + $0x8] sm:$0xff] %vm73, %v101
    // Predicated region
    $region22: #{tpu_custom_call.1} parent=1 // pred_check
      _
    $region23: #{tpu_custom_call.1} parent=1 // pred_check_branch
      %106 = sbr.rel (0) target = $region25
    $region24: #{tpu_custom_call.1} parent=1 // pred_region
      %108 = vsyncadd [#allocation4], 0
      %s109 = sshll.u32 [#allocation5], 4
      %s110 = int_to_ptr.vmem [resolvable:$true] %s109
      %s111 = sshll.u32 %s4, 4
      %s112 = int_to_ptr.hbm [resolvable:$true] %s111
      %117 = dma.vmem_to_hbm [thread:$0]  %s110, 256, %s112, [#allocation4], 128, 128, 8
    $region25: #{tpu_custom_call.1} parent=1 // pred_fallthru
      _
    // Predicated region
    $region26: #{tpu_custom_call.1} parent=1 // pred_check
      _
    $region27: #{tpu_custom_call.1} parent=1 // pred_check_branch
      %119 = sbr.rel (0) target = $region29
    $region28: #{tpu_custom_call.1} parent=1 // pred_region
      %121 = dma.done [#allocation4], 256
    $region29: #{tpu_custom_call.1} parent=1 // pred_fallthru
      _
    %122 = vsyncpa [#allocation3], 1
    %123 = vsyncpa [#allocation4], 1

</llo_original>
